<compile_context>
chip_gen: v6e
topology: v6e:2x2x1
jax: 0.10.0
libtpu: 0.0.40
codegen_flags: <defaults>
</compile_context>

<pallas_src>
import functools

import jax
import jax.numpy as jnp
from jax.experimental import pallas as pl
from jax.experimental.pallas import tpu as pltpu


# ---------------------------------------------------------------------------
# Tiling helpers
# ---------------------------------------------------------------------------

_VMEM_BUDGET = 32 * 1024 * 1024  # conservative across v5e/v6e/v7x


def _round_up(x, m):
    return ((x + m - 1) // m) * m


def _vmem_estimate(bt, tq, n, f_in, f_pad):
    """Rough per-step VMEM bytes: double-buffered I/O blocks + live values."""
    adj_b = 2 * bt * tq * n * 1                       # int8 adj (double buffered)
    hfull = 2 * bt * n * f_in * 4                     # full-node features
    hq = 2 * bt * tq * f_in * 4                       # query-row features
    out = 2 * bt * tq * f_pad * 4                     # output block
    wh = bt * n * f_pad * (4 + 2)                     # Wh f32 + bf16 copy
    inter = 4 * bt * tq * n * 4 + bt * tq * n * 2     # logits/p/attn f32 + bf16
    return adj_b + hfull + hq + out + wh + inter


def _pick_tiles(batch, n, f_in, f_pad):
    """Pick (batch_tile, row_tile) keeping the working set under budget."""
    tq = n
    if _vmem_estimate(1, n, n, f_in, f_pad) > _VMEM_BUDGET:
        for cand in (2048, 1024, 512, 256, 128, 64, 32):  # multiples of 32 (int8 adj)
            if cand < n and n % cand == 0 and \
                    _vmem_estimate(1, cand, n, f_in, f_pad) <= _VMEM_BUDGET:
                tq = cand
                break
    bt = 1
    if tq == n:  # whole graph per step -> pack several small graphs per step
        for cand in range(batch, 0, -1):
            if batch % cand == 0 and cand * n <= 1024 and \
                    _vmem_estimate(cand, n, n, f_in, f_pad) <= _VMEM_BUDGET:
                bt = cand
                break
    return bt, tq


# ---------------------------------------------------------------------------
# Kernel
# ---------------------------------------------------------------------------

def _gat_kernel(hfull_ref, hq_ref, adj_ref, w_ref, a_ref, o_ref, *, alpha, concat):
    # hfull_ref: (BT, N,  F_in)  f32   -- all nodes of this graph tile
    # hq_ref   : (BT, TQ, F_in)  f32   -- query rows of this grid step
    # adj_ref  : (BT, TQ, N)     int8  -- adjacency rows (mask only)
    # w_ref    : (F_in, F_pad)   f32   -- W, zero-padded to lane-dense F_pad
    # a_ref    : (1, F_pad)      f32   -- a[:F_out] + a[F_out:], zero-padded
    # o_ref    : (BT, TQ, F_pad) f32
    bt, n, f_in = hfull_ref.shape
    _, tq, _ = hq_ref.shape
    f_pad = w_ref.shape[1]

    w_b = w_ref[...].astype(jnp.bfloat16)

    # Wh for all nodes (rhs of attention @ Wh) and for the query rows of this
    # tile (attention logits).  bf16 MXU inputs, f32 accumulation.
    h_full = hfull_ref[...].reshape(bt * n, f_in).astype(jnp.bfloat16)
    wh_full = jnp.dot(h_full, w_b,
                      preferred_element_type=jnp.float32).reshape(bt, n, f_pad)

    h_q = hq_ref[...].reshape(bt * tq, f_in).astype(jnp.bfloat16)
    wh_q = jnp.dot(h_q, w_b,
                   preferred_element_type=jnp.float32).reshape(bt, tq, f_pad)

    # e = LeakyReLU(Wh @ (a1 + a2))  -- per-query-row scalar, exactly matching
    # the reference's Wh1 + Wh2 (no transpose).  Padded columns contribute 0.
    a_sum = a_ref[...]                                          # (1, F_pad)
    e = jnp.sum(wh_q * a_sum, axis=-1, keepdims=True)           # (BT, TQ, 1)
    e = jnp.where(e > 0, e, alpha * e)                          # LeakyReLU

    # Mask by adjacency and softmax over neighbors (dim=2 in torch).
    adj = adj_ref[...].astype(jnp.float32)                      # (BT, TQ, N)
    logits = jnp.where(adj > 0, e, jnp.float32(-9e15))
    m = jnp.max(logits, axis=-1, keepdims=True)
    p = jnp.exp(logits - m)
    denom = jnp.sum(p, axis=-1, keepdims=True)
    attention = p * pl.reciprocal(denom, approx=True)           # (BT, TQ, N)

    # TODO(synk): F.dropout on attention is a no-op in eval mode; training-mode
    # dropout (pltpu.prng_seed / prng_random_bits) is not implemented here.

    # h' = attention @ Wh   (bf16 MXU inputs, f32 accumulation)
    h_prime = jnp.einsum("bqk,bko->bqo",
                         attention.astype(jnp.bfloat16),
                         wh_full.astype(jnp.bfloat16),
                         preferred_element_type=jnp.float32)    # (BT, TQ, F_pad)

    if concat:
        h_prime = jnp.where(h_prime > 0, h_prime, jnp.exp(h_prime) - 1.0)  # ELU

    o_ref[...] = h_prime.astype(o_ref.dtype)


# ---------------------------------------------------------------------------
# Wrapper
# ---------------------------------------------------------------------------

def gat_forward(h, adj, W, a, *, alpha=0.2, concat=True):
    """h: (B, N, F_in) f32, adj: (B, N, N), W: (F_in, F_out), a: (2*F_out, 1)."""
    B, N, F_in = h.shape
    F_out = W.shape[1]
    F_pad = _round_up(F_out, 128)        # lane-dense output -> unmasked stores

    # Fold the two halves of `a` (reference adds Wh1 + Wh2 with NO transpose,
    # so e == Wh @ (a[:F_out] + a[F_out:]) exactly); zero-pad W / a_sum so the
    # padded output columns are exactly zero.
    a_sum = (a[:F_out, 0] + a[F_out:, 0]).reshape(1, F_out).astype(jnp.float32)
    W_p = W.astype(jnp.float32)
    if F_pad != F_out:
        a_sum = jnp.pad(a_sum, ((0, 0), (0, F_pad - F_out)))
        W_p = jnp.pad(W_p, ((0, 0), (0, F_pad - F_out)))

    # adj is only a mask -> ship it as int8 (4x less HBM traffic).
    adj_i8 = (adj > 0).astype(jnp.int8)

    BT, TQ = _pick_tiles(B, N, F_in, F_pad)
    grid = (B // BT, N // TQ)

    est = _vmem_estimate(BT, TQ, N, F_in, F_pad)
    vmem_limit = int(min(max(2 * est, 32 * 1024 * 1024), 48 * 1024 * 1024))

    kernel = functools.partial(_gat_kernel, alpha=alpha, concat=concat)

    out_padded = pl.pallas_call(
        kernel,
        out_shape=jax.ShapeDtypeStruct((B, N, F_pad), jnp.float32),
        grid_spec=pltpu.PrefetchScalarGridSpec(
            num_scalar_prefetch=0,
            grid=grid,
            in_specs=[
                pl.BlockSpec((BT, N, F_in), lambda b, q: (b, 0, 0)),    # all nodes
                pl.BlockSpec((BT, TQ, F_in), lambda b, q: (b, q, 0)),   # query rows
                pl.BlockSpec((BT, TQ, N), lambda b, q: (b, q, 0)),      # adj rows
                pl.BlockSpec((F_in, F_pad), lambda b, q: (0, 0)),       # W (padded)
                pl.BlockSpec((1, F_pad), lambda b, q: (0, 0)),          # a1 + a2
            ],
            out_specs=pl.BlockSpec((BT, TQ, F_pad), lambda b, q: (b, q, 0)),
        ),
        compiler_params=pltpu.CompilerParams(
            dimension_semantics=("parallel", "parallel"),
            vmem_limit_bytes=vmem_limit,
        ),
    )(h.astype(jnp.float32), h.astype(jnp.float32), adj_i8, W_p, a_sum)

    if F_pad != F_out:
        out_padded = out_padded[..., :F_out]
    return out_padded


# ---------------------------------------------------------------------------
# Pure-JAX reference (mirrors the PyTorch forward, f32 throughout)
# ---------------------------------------------------------------------------

def _gat_reference(h, adj, W, a, *, alpha=0.2, concat=True):
    F_out = W.shape[1]
    wh = jnp.einsum("bnf,fo->bno", h, W)
    wh1 = wh @ a[:F_out, :]                 # (B, N, 1)
    wh2 = wh @ a[F_out:, :]                 # (B, N, 1)
    e = wh1 + wh2
    e = jnp.where(e > 0, e, alpha * e)
    logits = jnp.where(adj > 0, e, jnp.float32(-9e15))
    attention = jax.nn.softmax(logits, axis=2)
    h_prime = jnp.einsum("bij,bjo->bio", attention, wh)
    if concat:
        h_prime = jnp.where(h_prime > 0, h_prime, jnp.exp(h_prime) - 1.0)
    return h_prime


if __name__ == "__main__":
    key = jax.random.PRNGKey(0)
    k_h, k_adj, k_w, k_a = jax.random.split(key, 4)

    B, N, F_in, F_out = 2, 8, 16, 32
    alpha = 0.2

    h = jax.random.normal(k_h, (B, N, F_in), dtype=jnp.float32)
    # random adjacency with self loops, values in {0, 1, 2}
    adj = (jax.random.uniform(k_adj, (B, N, N)) > 0.5).astype(jnp.float32)
    adj = adj + jnp.eye(N, dtype=jnp.float32)[None]
    # exercise the "row with no neighbours" path (uniform 1/N attention)
    adj = adj.at[1, 3, :].set(0.0)

    # Xavier-uniform init (gain = 1.414), deterministic
    gain = 1.414
    bw = gain * (6.0 / (F_in + F_out)) ** 0.5
    W = jax.random.uniform(k_w, (F_in, F_out), jnp.float32, -bw, bw)
    ba = gain * (6.0 / (2 * F_out + 1)) ** 0.5
    a = jax.random.uniform(k_a, (2 * F_out, 1), jnp.float32, -ba, ba)

    out = gat_forward(h, adj, W, a, alpha=alpha, concat=True)
    out = jax.block_until_ready(out)

    ref = _gat_reference(h, adj, W, a, alpha=alpha, concat=True)
    assert out.shape == (B, N, F_out)
    # bf16 MXU inputs + approx reciprocal => tolerance relaxed vs f32 reference
    max_err = float(jnp.max(jnp.abs(out - ref)))
    assert jnp.allclose(out, ref, atol=5e-2, rtol=5e-2), (
        f"mismatch vs reference, max abs err = {max_err}")
    print("KERNEL_OK")
</pallas_src>

<mosaic_0001>
module attributes {stable_mosaic.version = 11 : i64} {
  func.func @_gat_kernel(%arg0: i32, %arg1: i32, %arg2: memref<2x8x16xf32, #tpu.memory_space<vmem>>, %arg3: memref<2x8x16xf32, #tpu.memory_space<vmem>>, %arg4: memref<2x8x8xi8, #tpu.memory_space<vmem>>, %arg5: memref<16x128xf32, #tpu.memory_space<vmem>>, %arg6: memref<1x128xf32, #tpu.memory_space<vmem>>, %arg7: memref<2x8x128xf32, #tpu.memory_space<vmem>>) attributes {dimension_semantics = [#tpu.dimension_semantics<parallel>, #tpu.dimension_semantics<parallel>], iteration_bounds = array<i64: 1, 1>, scalar_prefetch = 0 : i64, scratch_operands = 0 : i64, tpu.core_type = #tpu.core_type<tc>, window_params = [{transform_indices = @transform_0, window_bounds = array<i64: 2, 8, 16>}, {transform_indices = @transform_1, window_bounds = array<i64: 2, 8, 16>}, {transform_indices = @transform_2, window_bounds = array<i64: 2, 8, 8>}, {pipeline_mode = #tpu.pipeline_mode<synchronous>, transform_indices = @transform_3, window_bounds = array<i64: 16, 128>}, {pipeline_mode = #tpu.pipeline_mode<synchronous>, transform_indices = @transform_4, window_bounds = array<i64: 1, 128>}, {transform_indices = @transform_5, window_bounds = array<i64: 2, 8, 128>}]} {
    %c0 = arith.constant 0 : index
    %c0_0 = arith.constant 0 : index
    %0 = vector.load %arg5[%c0, %c0_0] : memref<16x128xf32, #tpu.memory_space<vmem>>, vector<16x128xf32>
    %1 = arith.truncf %0 : vector<16x128xf32> to vector<16x128xbf16>
    %c0_1 = arith.constant 0 : index
    %c0_2 = arith.constant 0 : index
    %c0_3 = arith.constant 0 : index
    %2 = vector.load %arg2[%c0_1, %c0_2, %c0_3] : memref<2x8x16xf32, #tpu.memory_space<vmem>>, vector<2x8x16xf32>
    %3 = vector.shape_cast %2 : vector<2x8x16xf32> to vector<16x16xf32>
    %4 = arith.truncf %3 : vector<16x16xf32> to vector<16x16xbf16>
    %cst = arith.constant dense<0.000000e+00> : vector<16x128xf32>
    %5 = tpu.matmul %4, %1, %cst {dimension_numbers = #tpu.dot_dimension_numbers<[1], [0], [0], [1], [0, 0, 1, 1], [], []>} : vector<16x16xbf16>, vector<16x128xbf16>, vector<16x128xf32> -> vector<16x128xf32>
    %6 = vector.shape_cast %5 : vector<16x128xf32> to vector<2x8x128xf32>
    %c0_4 = arith.constant 0 : index
    %c0_5 = arith.constant 0 : index
    %c0_6 = arith.constant 0 : index
    %7 = vector.load %arg3[%c0_4, %c0_5, %c0_6] : memref<2x8x16xf32, #tpu.memory_space<vmem>>, vector<2x8x16xf32>
    %8 = vector.shape_cast %7 : vector<2x8x16xf32> to vector<16x16xf32>
    %9 = arith.truncf %8 : vector<16x16xf32> to vector<16x16xbf16>
    %cst_7 = arith.constant dense<0.000000e+00> : vector<16x128xf32>
    %10 = tpu.matmul %9, %1, %cst_7 {dimension_numbers = #tpu.dot_dimension_numbers<[1], [0], [0], [1], [0, 0, 1, 1], [], []>} : vector<16x16xbf16>, vector<16x128xbf16>, vector<16x128xf32> -> vector<16x128xf32>
    %11 = vector.shape_cast %10 : vector<16x128xf32> to vector<2x8x128xf32>
    %c0_8 = arith.constant 0 : index
    %c0_9 = arith.constant 0 : index
    %12 = vector.load %arg6[%c0_8, %c0_9] : memref<1x128xf32, #tpu.memory_space<vmem>>, vector<1x128xf32>
    %13 = vector.shape_cast %12 : vector<1x128xf32> to vector<1x1x128xf32>
    %14 = vector.broadcast %13 : vector<1x1x128xf32> to vector<2x8x128xf32>
    %15 = arith.mulf %11, %14 : vector<2x8x128xf32>
    %cst_10 = arith.constant dense<0.000000e+00> : vector<2x8xf32>
    %16 = vector.multi_reduction <add>, %15, %cst_10 [2] : vector<2x8x128xf32> to vector<2x8xf32>
    %17 = vector.shape_cast %16 : vector<2x8xf32> to vector<2x8x1xf32>
    %cst_11 = arith.constant 0.000000e+00 : f32
    %18 = vector.broadcast %cst_11 : f32 to vector<2x8x1xf32>
    %19 = arith.cmpf ogt, %17, %18 : vector<2x8x1xf32>
    %cst_12 = arith.constant 2.000000e-01 : f32
    %20 = vector.broadcast %cst_12 : f32 to vector<2x8x1xf32>
    %21 = arith.mulf %20, %17 : vector<2x8x1xf32>
    %22 = arith.select %19, %17, %21 : vector<2x8x1xi1>, vector<2x8x1xf32>
    %c0_13 = arith.constant 0 : index
    %c0_14 = arith.constant 0 : index
    %c0_15 = arith.constant 0 : index
    %23 = vector.load %arg4[%c0_13, %c0_14, %c0_15] : memref<2x8x8xi8, #tpu.memory_space<vmem>>, vector<2x8x8xi8>
    %24 = arith.sitofp %23 : vector<2x8x8xi8> to vector<2x8x8xf32>
    %cst_16 = arith.constant 0.000000e+00 : f32
    %25 = vector.broadcast %cst_16 : f32 to vector<2x8x8xf32>
    %26 = arith.cmpf ogt, %24, %25 : vector<2x8x8xf32>
    %cst_17 = arith.constant -9.000000e+15 : f32
    %27 = vector.shape_cast %22 : vector<2x8x1xf32> to vector<2x8x1xf32>
    %28 = vector.broadcast %27 : vector<2x8x1xf32> to vector<2x8x8xf32>
    %29 = vector.broadcast %cst_17 : f32 to vector<2x8x8xf32>
    %30 = arith.select %26, %28, %29 : vector<2x8x8xi1>, vector<2x8x8xf32>
    %cst_18 = arith.constant dense<0xFF800000> : vector<2x8xf32>
    %31 = vector.multi_reduction <maximumf>, %30, %cst_18 [2] : vector<2x8x8xf32> to vector<2x8xf32>
    %32 = vector.shape_cast %31 : vector<2x8xf32> to vector<2x8x1xf32>
    %33 = vector.broadcast %32 : vector<2x8x1xf32> to vector<2x8x8xf32>
    %34 = arith.subf %30, %33 : vector<2x8x8xf32>
    %35 = math.exp %34 : vector<2x8x8xf32>
    %cst_19 = arith.constant dense<0.000000e+00> : vector<2x8xf32>
    %36 = vector.multi_reduction <add>, %35, %cst_19 [2] : vector<2x8x8xf32> to vector<2x8xf32>
    %37 = vector.shape_cast %36 : vector<2x8xf32> to vector<2x8x1xf32>
    %38 = tpu.reciprocal %37 {approx = true} : vector<2x8x1xf32> -> vector<2x8x1xf32>
    %39 = vector.broadcast %38 : vector<2x8x1xf32> to vector<2x8x8xf32>
    %40 = arith.mulf %35, %39 : vector<2x8x8xf32>
    %41 = arith.truncf %40 : vector<2x8x8xf32> to vector<2x8x8xbf16>
    %42 = arith.truncf %6 : vector<2x8x128xf32> to vector<2x8x128xbf16>
    "tpu.trace_start"() <{level = 10 : i32, message = "bqk,bko->bqo"}> : () -> ()
    %cst_20 = arith.constant dense<0.000000e+00> : vector<2x8x128xf32>
    %43 = tpu.matmul %41, %42, %cst_20 {dimension_numbers = #tpu.dot_dimension_numbers<[2], [1], [1], [2], [0, 0, 0, 1, 1, 2], [0], [0]>} : vector<2x8x8xbf16>, vector<2x8x128xbf16>, vector<2x8x128xf32> -> vector<2x8x128xf32>
    %cst_21 = arith.constant 0.000000e+00 : f32
    "tpu.trace_stop"() : () -> ()
    %44 = vector.broadcast %cst_21 : f32 to vector<2x8x128xf32>
    %45 = arith.cmpf ogt, %43, %44 : vector<2x8x128xf32>
    %46 = math.exp %43 : vector<2x8x128xf32>
    %cst_22 = arith.constant 1.000000e+00 : f32
    %47 = vector.broadcast %cst_22 : f32 to vector<2x8x128xf32>
    %48 = arith.subf %46, %47 : vector<2x8x128xf32>
    %49 = arith.select %45, %43, %48 : vector<2x8x128xi1>, vector<2x8x128xf32>
    %c0_23 = arith.constant 0 : index
    %c0_24 = arith.constant 0 : index
    %c0_25 = arith.constant 0 : index
    %50 = vector.load %arg7[%c0_23, %c0_24, %c0_25] : memref<2x8x128xf32, #tpu.memory_space<vmem>>, vector<2x8x128xf32>
    tpu.vector_store %arg7[%c0_23, %c0_24, %c0_25], %49 {strides = array<i32>} : memref<2x8x128xf32, #tpu.memory_space<vmem>>, vector<2x8x128xf32>,
    return
  }
  func.func @transform_0(%arg0: i32, %arg1: i32) -> (i32, i32, i32) {
    %c0_i32 = arith.constant 0 : i32
    %c0_i32_0 = arith.constant 0 : i32
    %c0_i32_1 = arith.constant 0 : i32
    return %arg0, %c0_i32, %c0_i32_0 : i32, i32, i32
  }
  func.func @transform_1(%arg0: i32, %arg1: i32) -> (i32, i32, i32) {
    %c0_i32 = arith.constant 0 : i32
    %c0_i32_0 = arith.constant 0 : i32
    return %arg0, %arg1, %c0_i32 : i32, i32, i32
  }
  func.func @transform_2(%arg0: i32, %arg1: i32) -> (i32, i32, i32) {
    %c0_i32 = arith.constant 0 : i32
    %c0_i32_0 = arith.constant 0 : i32
    return %arg0, %arg1, %c0_i32 : i32, i32, i32
  }
  func.func @transform_3(%arg0: i32, %arg1: i32) -> (i32, i32) {
    %c0_i32 = arith.constant 0 : i32
    %c0_i32_0 = arith.constant 0 : i32
    %c0_i32_1 = arith.constant 0 : i32
    return %c0_i32, %c0_i32_0 : i32, i32
  }
  func.func @transform_4(%arg0: i32, %arg1: i32) -> (i32, i32) {
    %c0_i32 = arith.constant 0 : i32
    %c0_i32_0 = arith.constant 0 : i32
    %c0_i32_1 = arith.constant 0 : i32
    return %c0_i32, %c0_i32_0 : i32, i32
  }
  func.func @transform_5(%arg0: i32, %arg1: i32) -> (i32, i32, i32) {
    %c0_i32 = arith.constant 0 : i32
    %c0_i32_0 = arith.constant 0 : i32
    return %arg0, %arg1, %c0_i32 : i32, i32, i32
  }
}

</mosaic_0001>

<llo_original>
// kernel: tpu_custom_call.1
$region0: #{tpu_custom_call.1}
  #allocation0 [shape = 'u32[]', space=smem, size = 0x4, offset = 0x4, fixed_abs, tag = 'smem constant byte address 0x4 - core index']
  #allocation1 [shape = 'u32[144,128]{1,0:T(1,128)}', space=vmem, size = 0x12000, scoped, tag = 'internal scratch']
  %s0 = inlined_call_operand.hbm [shape: f32[2,8,16], index: 0, kind: input, shape index: {}]
  %s1 = inlined_call_operand.hbm [shape: f32[2,8,16], index: 1, kind: input, shape index: {}]
  %s2 = inlined_call_operand.hbm [shape: s8[2,8,8], index: 2, kind: input, shape index: {}]
  %s3 = inlined_call_operand.hbm [shape: f32[16,128], index: 3, kind: input, shape index: {}]
  %s4 = inlined_call_operand.vmem [shape: f32[1,128], index: 4, kind: input, shape index: {}]
  %s5 = inlined_call_operand.hbm [shape: f32[2,8,128], index: 5, kind: output, shape index: {}]
  %s6 = sld [smem:[#allocation0]]
  $region46: #{tpu_custom_call.1} parent=0
    _
  %s8 = ssub.s32 1, %s6
  %s9 = scalar_select 0, %s8, %s6
  $region1: #{tpu_custom_call.1} parent=0
    #allocation2 [shape = 'u8[8192]{0}', space=vmem, size = 0x2000, scoped, tag = 'input window, operand 0, single buffered']
    #allocation3 [shape = 's32[1]{0}', space=sflag, size = 0x4, scoped, tag = 'scoped memory for tpu_custom_call.1']
    #allocation4 [shape = 's32[1]{0}', space=sflag, size = 0x4, scoped, tag = 'scoped memory for tpu_custom_call.1']
    #allocation5 [shape = 'u8[8192]{0}', space=vmem, size = 0x2000, scoped, tag = 'input window, operand 1, single buffered']
    #allocation6 [shape = 's32[1]{0}', space=sflag, size = 0x4, scoped, tag = 'scoped memory for tpu_custom_call.1']
    #allocation7 [shape = 'u8[2048]{0}', space=vmem, size = 0x800, scoped, tag = 'input window, operand 2, single buffered']
    #allocation8 [shape = 'u8[8192]{0}', space=vmem, size = 0x2000, scoped, tag = 'input window, operand 3, single buffered']
    #allocation9 [shape = 's32[1]{0}', space=sflag, size = 0x4, scoped, tag = 'scoped memory for tpu_custom_call.1']
    #allocation10 [shape = 'u8[8192]{0}', space=vmem, size = 0x2000, scoped, tag = 'output window, operand 0, single buffered']
    %10 = vsyncpa [#allocation3], 0
    %11 = vsyncpa [#allocation6], 0
    %12 = vsyncpa [#allocation9], 0
    %13 = vsyncpa [#allocation4], 0
    // Predicated region
    $region2: #{tpu_custom_call.1} parent=1 // pred_check
      _
    $region3: #{tpu_custom_call.1} parent=1 // pred_check_branch
      %15 = sbr.rel (0) target = $region5
    $region4: #{tpu_custom_call.1} parent=1 // pred_region
      %s17 = ssub.s32 256, 256
      %18 = vsyncadd [#allocation3], %s17
      %s19 = sshll.u32 [#allocation2], 4
      %s20 = int_to_ptr.vmem [resolvable:$true] %s19
      %25 = dma.hbm_to_vmem [thread:$0]  %s0, 256, %s20, [#allocation3], 128, 128, 8
    $region5: #{tpu_custom_call.1} parent=1 // pred_fallthru
      _
    // Predicated region
    $region6: #{tpu_custom_call.1} parent=1 // pred_check
      _
    $region7: #{tpu_custom_call.1} parent=1 // pred_check_branch
      %27 = sbr.rel (0) target = $region9
    $region8: #{tpu_custom_call.1} parent=1 // pred_region
      %s29 = ssub.s32 256, 256
      %30 = vsyncadd [#allocation6], %s29
      %s31 = sshll.u32 [#allocation5], 4
      %s32 = int_to_ptr.vmem [resolvable:$true] %s31
      %37 = dma.hbm_to_vmem [thread:$0]  %s1, 256, %s32, [#allocation6], 128, 128, 8
    $region9: #{tpu_custom_call.1} parent=1 // pred_fallthru
      _
    // Predicated region
    $region10: #{tpu_custom_call.1} parent=1 // pred_check
      _
    $region11: #{tpu_custom_call.1} parent=1 // pred_check_branch
      %39 = sbr.rel (0) target = $region13
    $region12: #{tpu_custom_call.1} parent=1 // pred_region
      %s41 = ssub.s32 64, 64
      %42 = vsyncadd [#allocation6], %s41
      %s43 = sshll.u32 [#allocation7], 4
      %s44 = int_to_ptr.vmem [resolvable:$true] %s43
      %49 = dma.hbm_to_vmem [thread:$0]  %s2, 64, %s44, [#allocation6], 32, 32, 2
    $region13: #{tpu_custom_call.1} parent=1 // pred_fallthru
      _
    // Predicated region
    $region14: #{tpu_custom_call.1} parent=1 // pred_check
      _
    $region15: #{tpu_custom_call.1} parent=1 // pred_check_branch
      %51 = sbr.rel (0) target = $region17
    $region16: #{tpu_custom_call.1} parent=1 // pred_region
      %s53 = ssub.s32 256, 256
      %54 = vsyncadd [#allocation9], %s53
      %s55 = sshll.u32 [#allocation8], 4
      %s56 = int_to_ptr.vmem [resolvable:$true] %s55
      %61 = dma.hbm_to_vmem [thread:$0]  %s3, 256, %s56, [#allocation9], 128, 128, 8
    $region17: #{tpu_custom_call.1} parent=1 // pred_fallthru
      _
    // Predicated region
    $region18: #{tpu_custom_call.1} parent=1 // pred_check
      _
    $region19: #{tpu_custom_call.1} parent=1 // pred_check_branch
      %63 = sbr.rel (0) target = $region21
    $region20: #{tpu_custom_call.1} parent=1 // pred_region
      _
    $region21: #{tpu_custom_call.1} parent=1 // pred_fallthru
      _
    // Predicated region
    $region22: #{tpu_custom_call.1} parent=1 // pred_check
      _
    $region23: #{tpu_custom_call.1} parent=1 // pred_check_branch
      %65 = sbr.rel (0) target = $region25
    $region24: #{tpu_custom_call.1} parent=1 // pred_region
      %66 = dma.done [#allocation3], 256
    $region25: #{tpu_custom_call.1} parent=1 // pred_fallthru
      _
    // Predicated region
    $region26: #{tpu_custom_call.1} parent=1 // pred_check
      _
    $region27: #{tpu_custom_call.1} parent=1 // pred_check_branch
      %68 = sbr.rel (0) target = $region29
    $region28: #{tpu_custom_call.1} parent=1 // pred_region
      %69 = dma.done [#allocation6], 256
    $region29: #{tpu_custom_call.1} parent=1 // pred_fallthru
      _
    // Predicated region
    $region30: #{tpu_custom_call.1} parent=1 // pred_check
      _
    $region31: #{tpu_custom_call.1} parent=1 // pred_check_branch
      %71 = sbr.rel (0) target = $region33
    $region32: #{tpu_custom_call.1} parent=1 // pred_region
      %72 = dma.done [#allocation6], 64
    $region33: #{tpu_custom_call.1} parent=1 // pred_fallthru
      _
    // Predicated region
    $region34: #{tpu_custom_call.1} parent=1 // pred_check
      _
    $region35: #{tpu_custom_call.1} parent=1 // pred_check_branch
      %74 = sbr.rel (0) target = $region37
    $region36: #{tpu_custom_call.1} parent=1 // pred_region
      %75 = dma.done [#allocation9], 256
    $region37: #{tpu_custom_call.1} parent=1 // pred_fallthru
      _
    %v77 = vld [vmem:[#allocation8] sm:$0xff]
    %v78 = vld [vmem:[#allocation8 + $0x8] sm:$0xff]
    %v79 = vpack.c.bf16 %v78, %v77
    %v80 = vld [vmem:[#allocation2] sm:$0xff]
    %v81 = vld [vmem:[#allocation2 + $0x8] sm:$0xff]
    %v82 = vpack.c.bf16 %v81, %v80
    %vm83 = vcmask 130048
    %v85 = vsel %vm83, %v82, 0
    %87 = vmatprep.subr.bf16.mxu0 0
    %88 = vmatpush1.bf16.msra.mxu0 0
    %89 = vmatprep.subr.bf16.mxu0 0
    %90 = vmatpush1.bf16.msra.mxu0 0
    %91 = vmatprep.subr.bf16.mxu0 0
    %92 = vmatpush1.bf16.msra.mxu0 0
    %93 = vmatprep.subr.bf16.mxu0 0
    %94 = vmatpush1.bf16.msra.mxu0 0
    %95 = vmatprep.subr.bf16.mxu0 0
    %96 = vmatpush1.bf16.msra.mxu0 0
    %97 = vmatprep.subr.bf16.mxu0 0
    %98 = vmatpush1.bf16.msra.mxu0 0
    %99 = vmatprep.subr.bf16.mxu0 0
    %100 = vmatpush1.bf16.msra.mxu0 0
    %101 = vmatprep.subr.bf16.mxu0 0
    %102 = vmatpush1.bf16.msra.mxu0 %v79
    %103 = vmatprep.subr.bf16.mxu0 0
    %104 = vmatpush2.bf16.msra.mxu0 0
    %105 = vmatprep.subr.bf16.mxu0 0
    %106 = vmatpush2.bf16.msra.mxu0 0
    %107 = vmatprep.subr.bf16.mxu0 0
    %108 = vmatpush2.bf16.msra.mxu0 0
    %109 = vmatprep.subr.bf16.mxu0 0
    %110 = vmatpush2.bf16.msra.mxu0 0
    %111 = vmatprep.subr.bf16.mxu0 0
    %112 = vmatpush2.bf16.msra.mxu0 0
    %113 = vmatprep.subr.bf16.mxu0 0
    %114 = vmatpush2.bf16.msra.mxu0 0
    %115 = vmatprep.subr.bf16.mxu0 0
    %116 = vmatpush2.bf16.msra.mxu0 0
    %117 = vmatprep.subr.bf16.mxu0 0
    %118 = vmatpush2.bf16.msra.mxu0 0
    %119 = vmatprep.mubr.bf16.mxu0 0
    %120 = vmatmul.mubr.bf16.gmra.mxu0 %v85
    %v121 = vpop.f32.mrf.mxu0
    %v122 = vadd.f32 0.0, %v121
    %v123 = vpop.f32.mrf.mxu0
    %v124 = vpop.f32.mrf.mxu0
    %v125 = vadd.f32 0.0, %v124
    %v126 = vpop.f32.mrf.mxu0
    %127 = vdwg.mxu0
    %v128 = vld [vmem:[#allocation5] sm:$0xff]
    %v129 = vld [vmem:[#allocation5 + $0x8] sm:$0xff]
    %v130 = vpack.c.bf16 %v129, %v128
    %v132 = vsel %vm83, %v130, 0
    %134 = vmatprep.subr.bf16.mxu0 0
    %135 = vmatpush1.bf16.msra.mxu0 0
    %136 = vmatprep.subr.bf16.mxu0 0
    %137 = vmatpush1.bf16.msra.mxu0 0
    %138 = vmatprep.subr.bf16.mxu0 0
    %139 = vmatpush1.bf16.msra.mxu0 0
    %140 = vmatprep.subr.bf16.mxu0 0
    %141 = vmatpush1.bf16.msra.mxu0 0
    %142 = vmatprep.subr.bf16.mxu0 0
    %143 = vmatpush1.bf16.msra.mxu0 0
    %144 = vmatprep.subr.bf16.mxu0 0
    %145 = vmatpush1.bf16.msra.mxu0 0
    %146 = vmatprep.subr.bf16.mxu0 0
    %147 = vmatpush1.bf16.msra.mxu0 0
    %148 = vmatprep.subr.bf16.mxu0 0
    %149 = vmatpush1.bf16.msra.mxu0 %v79
    %150 = vmatprep.subr.bf16.mxu0 0
    %151 = vmatpush2.bf16.msra.mxu0 0
    %152 = vmatprep.subr.bf16.mxu0 0
    %153 = vmatpush2.bf16.msra.mxu0 0
    %154 = vmatprep.subr.bf16.mxu0 0
    %155 = vmatpush2.bf16.msra.mxu0 0
    %156 = vmatprep.subr.bf16.mxu0 0
    %157 = vmatpush2.bf16.msra.mxu0 0
    %158 = vmatprep.subr.bf16.mxu0 0
    %159 = vmatpush2.bf16.msra.mxu0 0
    %160 = vmatprep.subr.bf16.mxu0 0
    %161 = vmatpush2.bf16.msra.mxu0 0
    %162 = vmatprep.subr.bf16.mxu0 0
    %163 = vmatpush2.bf16.msra.mxu0 0
    %164 = vmatprep.subr.bf16.mxu0 0
    %165 = vmatpush2.bf16.msra.mxu0 0
    %166 = vmatprep.mubr.bf16.mxu0 0
    %167 = vmatmul.mubr.bf16.gmra.mxu0 %v132
    %v168 = vpop.f32.mrf.mxu0
    %v169 = vadd.f32 0.0, %v168
    %v170 = vpop.f32.mrf.mxu0
    %v171 = vpop.f32.mrf.mxu0
    %v172 = vadd.f32 0.0, %v171
    %v173 = vpop.f32.mrf.mxu0
    %174 = vdwg.mxu0
    %v175 = vld [vmem:[%s4] sm:$0x1]
    %v177 = vlaneseq
    %v178 = vshrl.u32 %v177, 7
    %v179 = vsub.s32 0, %v178
    %v180 = vrot.slane %v175, %v179
    %v182 = vmul.f32 %v169, %v180
    %v183 = vmul.f32 %v172, %v180
    %184 = vadd.xlane.f32.xlu0 %v182
    %v185 = vpop.xlane.xlu0 %184
    %186 = vadd.xlane.f32.xlu0 %v183
    %v187 = vpop.xlane.xlu0 %186
    %vm188 = vcmp.gt.f32.partialorder %v185, 0.0
    %vm189 = vcmp.gt.f32.partialorder %v187, 0.0
    %v190 = vmul.f32 %v185, 0.2
    %v191 = vmul.f32 %v187, 0.2
    %v192 = vsel %vm188, %v185, %v190
    %v193 = vsel %vm189, %v187, %v191
    %v194 = vld [vmem:[#allocation7] sm:$0x3]
    %v195 = vld [vmem:[#allocation7 + $0x2] sm:$0x3]
    %v196 = vunpack.c.0.s8 %v194
    %v197 = vunpack.c.0.s8 %v195
    %v198 = vcvt.s32.f32 %v196
    %v199 = vcvt.s32.f32 %v197
    %vm200 = vcmp.gt.f32.partialorder %v198, 0.0
    %vm201 = vcmp.gt.f32.partialorder %v199, 0.0
    %v202 = vsel %vm200, %v192, -9e+15
    %v203 = vsel %vm201, %v193, -9e+15
    %vm204 = vcmask 64512
    %v205 = vsel %vm204, %v202, -inf
    %206 = vmax.xlane.f32.xlu0 %v205
    %v207 = vpop.xlane.xlu0 %206
    %v208 = vsel %vm204, %v203, -inf
    %209 = vmax.xlane.f32.xlu0 %v208
    %v210 = vpop.xlane.xlu0 %209
    %v211 = vsub.f32 %v202, %v207
    %v212 = vsub.f32 %v203, %v210
    %v213 = vmul.f32 %v211, 1.442695
    %v214 = vpow.pop %v213
    %v215 = vmul.f32 %v212, 1.442695
    %v216 = vpow.pop %v215
    %v217 = vsel %vm204, %v214, 0.0
    %218 = vadd.xlane.f32.xlu0 %v217
    %v219 = vpop.xlane.xlu0 %218
    %v220 = vsel %vm204, %v216, 0.0
    %221 = vadd.xlane.f32.xlu0 %v220
    %v222 = vpop.xlane.xlu0 %221
    %v223 = vrcp.pop %v219
    %v224 = vrcp.pop %v222
    %v225 = vmul.f32 %v214, %v223
    %v226 = vmul.f32 %v216, %v224
    %v227 = vpack.c.bf16 %v225, %v225
    %v228 = vpack.c.bf16 %v226, %v226
    %v229 = vpack.c.bf16 %v122, %v122
    %v230 = vpack.c.bf16 %v125, %v125
    %v232 = vsel %vm204, %v227, 0
    %vm234 = vcmask 1043456
    %v236 = vsel %vm234, %v229, 0
    %238 = vmatprep.subr.bf16.mxu0 0
    %239 = vmatpush1.bf16.msra.mxu0 0
    %240 = vmatprep.subr.bf16.mxu0 0
    %241 = vmatpush1.bf16.msra.mxu0 0
    %242 = vmatprep.subr.bf16.mxu0 0
    %243 = vmatpush1.bf16.msra.mxu0 0
    %244 = vmatprep.subr.bf16.mxu0 0
    %245 = vmatpush1.bf16.msra.mxu0 0
    %246 = vmatprep.subr.bf16.mxu0 0
    %247 = vmatpush1.bf16.msra.mxu0 0
    %248 = vmatprep.subr.bf16.mxu0 0
    %249 = vmatpush1.bf16.msra.mxu0 0
    %250 = vmatprep.subr.bf16.mxu0 0
    %251 = vmatpush1.bf16.msra.mxu0 0
    %252 = vmatprep.subr.bf16.mxu0 0
    %253 = vmatpush1.bf16.msra.mxu0 %v236
    %254 = vmatprep.subr.bf16.mxu0 0
    %255 = vmatpush2.bf16.msra.mxu0 0
    %256 = vmatprep.subr.bf16.mxu0 0
    %257 = vmatpush2.bf16.msra.mxu0 0
    %258 = vmatprep.subr.bf16.mxu0 0
    %259 = vmatpush2.bf16.msra.mxu0 0
    %260 = vmatprep.subr.bf16.mxu0 0
    %261 = vmatpush2.bf16.msra.mxu0 0
    %262 = vmatprep.subr.bf16.mxu0 0
    %263 = vmatpush2.bf16.msra.mxu0 0
    %264 = vmatprep.subr.bf16.mxu0 0
    %265 = vmatpush2.bf16.msra.mxu0 0
    %266 = vmatprep.subr.bf16.mxu0 0
    %267 = vmatpush2.bf16.msra.mxu0 0
    %268 = vmatprep.subr.bf16.mxu0 0
    %269 = vmatpush2.bf16.msra.mxu0 0
    %270 = vmatprep.mubr.bf16.mxu0 0
    %271 = vmatmul.mubr.bf16.gmra.mxu0 %v232
    %v272 = vpop.f32.mrf.mxu0
    %v273 = vadd.f32 0.0, %v272
    %v274 = vpop.f32.mrf.mxu0
    %v275 = vpop.f32.mrf.mxu0
    %v276 = vpop.f32.mrf.mxu0
    %277 = vdwg.mxu0
    %v279 = vsel %vm204, %v228, 0
    %v282 = vsel %vm234, %v230, 0
    %284 = vmatprep.subr.bf16.mxu0 0
    %285 = vmatpush1.bf16.msra.mxu0 0
    %286 = vmatprep.subr.bf16.mxu0 0
    %287 = vmatpush1.bf16.msra.mxu0 0
    %288 = vmatprep.subr.bf16.mxu0 0
    %289 = vmatpush1.bf16.msra.mxu0 0
    %290 = vmatprep.subr.bf16.mxu0 0
    %291 = vmatpush1.bf16.msra.mxu0 0
    %292 = vmatprep.subr.bf16.mxu0 0
    %293 = vmatpush1.bf16.msra.mxu0 0
    %294 = vmatprep.subr.bf16.mxu0 0
    %295 = vmatpush1.bf16.msra.mxu0 0
    %296 = vmatprep.subr.bf16.mxu0 0
    %297 = vmatpush1.bf16.msra.mxu0 0
    %298 = vmatprep.subr.bf16.mxu0 0
    %299 = vmatpush1.bf16.msra.mxu0 %v282
    %300 = vmatprep.subr.bf16.mxu0 0
    %301 = vmatpush2.bf16.msra.mxu0 0
    %302 = vmatprep.subr.bf16.mxu0 0
    %303 = vmatpush2.bf16.msra.mxu0 0
    %304 = vmatprep.subr.bf16.mxu0 0
    %305 = vmatpush2.bf16.msra.mxu0 0
    %306 = vmatprep.subr.bf16.mxu0 0
    %307 = vmatpush2.bf16.msra.mxu0 0
    %308 = vmatprep.subr.bf16.mxu0 0
    %309 = vmatpush2.bf16.msra.mxu0 0
    %310 = vmatprep.subr.bf16.mxu0 0
    %311 = vmatpush2.bf16.msra.mxu0 0
    %312 = vmatprep.subr.bf16.mxu0 0
    %313 = vmatpush2.bf16.msra.mxu0 0
    %314 = vmatprep.subr.bf16.mxu0 0
    %315 = vmatpush2.bf16.msra.mxu0 0
    %316 = vmatprep.mubr.bf16.mxu0 0
    %317 = vmatmul.mubr.bf16.gmra.mxu0 %v279
    %v318 = vpop.f32.mrf.mxu0
    %v319 = vadd.f32 0.0, %v318
    %v320 = vpop.f32.mrf.mxu0
    %v321 = vpop.f32.mrf.mxu0
    %v322 = vpop.f32.mrf.mxu0
    %323 = vdwg.mxu0
    %vm324 = vcmp.gt.f32.partialorder %v273, 0.0
    %vm325 = vcmp.gt.f32.partialorder %v319, 0.0
    %v326 = vmul.f32 %v273, 1.442695
    %v327 = vpow.pop %v326
    %v328 = vmul.f32 %v319, 1.442695
    %v329 = vpow.pop %v328
    %v330 = vsub.f32 %v327, 1.0
    %v331 = vsub.f32 %v329, 1.0
    %v332 = vsel %vm324, %v273, %v330
    %v333 = vsel %vm325, %v319, %v331
    %334 = vst [vmem:[#allocation10] sm:$0xff] %v332
    %335 = vst [vmem:[#allocation10 + $0x8] sm:$0xff] %v333
    // Predicated region
    $region38: #{tpu_custom_call.1} parent=1 // pred_check
      _
    $region39: #{tpu_custom_call.1} parent=1 // pred_check_branch
      %337 = sbr.rel (0) target = $region41
    $region40: #{tpu_custom_call.1} parent=1 // pred_region
      %s339 = ssub.s32 256, 256
      %340 = vsyncadd [#allocation4], %s339
      %s341 = sshll.u32 [#allocation10], 4
      %s342 = int_to_ptr.vmem [resolvable:$true] %s341
      %347 = dma.vmem_to_hbm [thread:$0]  %s342, 256, %s5, [#allocation4], 128, 128, 8
    $region41: #{tpu_custom_call.1} parent=1 // pred_fallthru
      _
    // Predicated region
    $region42: #{tpu_custom_call.1} parent=1 // pred_check
      _
    $region43: #{tpu_custom_call.1} parent=1 // pred_check_branch
      %349 = sbr.rel (0) target = $region45
    $region44: #{tpu_custom_call.1} parent=1 // pred_region
      %350 = dma.done [#allocation4], 256
    $region45: #{tpu_custom_call.1} parent=1 // pred_fallthru
      _
    %351 = vsyncpa [#allocation3], 1
    %352 = vsyncpa [#allocation6], 1
    %353 = vsyncpa [#allocation9], 1
    %354 = vsyncpa [#allocation4], 1

</llo_original>
